<compile_context>
chip_gen: v7x
topology: tpu7x:2x2x1
jax: 0.10.0
libtpu: 0.0.40
codegen_flags: <defaults>
</compile_context>

<pallas_src>
import math

import jax
import jax.numpy as jnp
from jax import lax
from jax.experimental import pallas as pl
from jax.experimental.pallas import tpu as pltpu


def _multilinear_kernel(x_ref, h_ref, o_ref, acc_ref):
    # x_ref : (tm, tk)   tile of x            (batch, output_size)
    # h_ref : (tn, tk)   tile of heads2d      (L*I rows, output_size)
    # o_ref : (tm, tn)   tile of the (B, L*I) output
    # acc_ref: (tm, tn)  f32 accumulator, resident across the K axis
    @pl.when(pl.program_id(2) == 0)
    def _init():
        acc_ref[...] = jnp.zeros_like(acc_ref)

    # out[m, n] += sum_k x[m, k] * h[n, k]  -- contraction on the last dim of
    # both operands, no transposed copy materialized.
    acc_ref[...] += lax.dot_general(
        x_ref[...],
        h_ref[...],
        dimension_numbers=(((1,), (1,)), ((), ())),
        preferred_element_type=jnp.float32,
    )

    @pl.when(pl.program_id(2) == pl.num_programs(2) - 1)
    def _finalize():
        o_ref[...] = acc_ref[...].astype(o_ref.dtype)


def _pick_block(dim, align, target):
    """Largest multiple of `align` that divides `dim` and is <= target.
    Falls back to the full extent (always legal for a BlockSpec)."""
    if dim <= target or dim % align != 0:
        return dim
    t = (target // align) * align
    while t >= align:
        if dim % t == 0:
            return t
        t -= align
    return dim


def multilinear_forward(x, heads):
    """x: (B, output_size), heads: (L, input_size, output_size) ->
    (B, L, input_size), matching the PyTorch MultiLinear.forward."""
    B, O = x.shape
    L, I, O2 = heads.shape
    assert O == O2, "x last dim must equal output_size"

    N = L * I
    # heads is row-major contiguous, so this reshape is layout-free.
    heads2d = heads.reshape(N, O)

    # Adaptive tile sizes: full extent for small dims, aligned tiles otherwise.
    tm = _pick_block(B, 8, 256)     # batch rows (MXU M)
    tn = _pick_block(N, 128, 512)   # lane-dense output columns (MXU N)
    tk = _pick_block(O, 128, 512)   # contraction (K), gridded last

    grid = (B // tm, N // tn, O // tk)

    # Double-buffered VMEM footprint: 2x each input block, 2x output block,
    # plus the f32 accumulator. Cap at 48 MiB (v7x has 64 MiB physical VMEM).
    itemsize = jnp.dtype(x.dtype).itemsize
    vmem_needed = (2 * (tm * tk + tn * tk) * itemsize
                   + 2 * tm * tn * itemsize
                   + tm * tn * 4)
    vmem_limit = int(min(max(2 * vmem_needed, 32 * 1024 * 1024),
                         48 * 1024 * 1024))

    out2d = pl.pallas_call(
        _multilinear_kernel,
        out_shape=jax.ShapeDtypeStruct((B, N), x.dtype),
        grid_spec=pltpu.PrefetchScalarGridSpec(
            num_scalar_prefetch=0,
            grid=grid,
            in_specs=[
                pl.BlockSpec((tm, tk), lambda i, j, k: (i, k)),  # x tile
                pl.BlockSpec((tn, tk), lambda i, j, k: (j, k)),  # heads2d tile
            ],
            out_specs=pl.BlockSpec((tm, tn), lambda i, j, k: (i, j)),
            scratch_shapes=[pltpu.VMEM((tm, tn), jnp.float32)],
        ),
        compiler_params=pltpu.CompilerParams(
            dimension_semantics=("parallel", "parallel", "arbitrary"),
            vmem_limit_bytes=vmem_limit,
        ),
    )(x, heads2d)

    # Free reshape (no transpose): (B, L*I) -> (B, L, I).
    return out2d.reshape(B, L, I)


def init_multilinear_params(key, num_lanes, input_size, output_size):
    """Deterministic synthetic init mirroring the PyTorch __init__."""
    heads = jax.random.normal(
        key, (num_lanes, input_size, output_size), dtype=jnp.float32
    ) / math.sqrt(output_size)
    # Present in the module but unused in forward.
    bias = jnp.zeros((output_size,), dtype=jnp.float32)
    return heads, bias


if __name__ == "__main__":
    # Small shapes consistent with the module's forward:
    #   num_lanes=4, input_size=32, output_size=16, batch=2
    num_lanes, input_size, output_size = 4, 32, 16
    batch = 2

    key = jax.random.PRNGKey(0)
    k_heads, k_x = jax.random.split(key)

    heads, bias = init_multilinear_params(k_heads, num_lanes, input_size, output_size)
    x = jax.random.normal(k_x, (batch, output_size), dtype=jnp.float32)

    out = multilinear_forward(x, heads)
    out = jax.block_until_ready(out)

    # Reference check in plain JAX (same math as the PyTorch forward).
    ref = jnp.einsum("lio,bo->bli", heads, x)
    assert out.shape == (batch, num_lanes, input_size)
    assert jnp.allclose(out, ref, atol=1e-5, rtol=1e-5)

    print("KERNEL_OK")
</pallas_src>

<mosaic_0001>
module attributes {stable_mosaic.version = 11 : i64} {
  func.func @_multilinear_kernel(%arg0: i32, %arg1: i32, %arg2: i32, %arg3: memref<2x16xf32, #tpu.memory_space<vmem>>, %arg4: memref<128x16xf32, #tpu.memory_space<vmem>>, %arg5: memref<2x128xf32, #tpu.memory_space<vmem>>, %arg6: memref<2x128xf32, #tpu.memory_space<vmem>>) attributes {dimension_semantics = [#tpu.dimension_semantics<parallel>, #tpu.dimension_semantics<parallel>, #tpu.dimension_semantics<arbitrary>], iteration_bounds = array<i64: 1, 1, 1>, scalar_prefetch = 0 : i64, scratch_operands = 1 : i64, tpu.core_type = #tpu.core_type<tc>, window_params = [{transform_indices = @transform_0, window_bounds = array<i64: 2, 16>}, {transform_indices = @transform_1, window_bounds = array<i64: 128, 16>}, {transform_indices = @transform_2, window_bounds = array<i64: 2, 128>}]} {
    %c0_i32 = arith.constant 0 : i32
    %0 = arith.cmpi eq, %arg2, %c0_i32 : i32
    %1 = arith.extui %0 : i1 to i32
    %c0_i32_0 = arith.constant 0 : i32
    %2 = arith.cmpi ne, %1, %c0_i32_0 : i32
    scf.if %2 {
      %cst_10 = arith.constant 0.000000e+00 : f32
      %12 = vector.broadcast %cst_10 : f32 to vector<2x128xf32>
      %c0_11 = arith.constant 0 : index
      %c0_12 = arith.constant 0 : index
      %13 = vector.load %arg6[%c0_11, %c0_12] : memref<2x128xf32, #tpu.memory_space<vmem>>, vector<2x128xf32>
      tpu.vector_store %arg6[%c0_11, %c0_12], %12 {strides = array<i32>} : memref<2x128xf32, #tpu.memory_space<vmem>>, vector<2x128xf32>,
    } else {
    }
    %c0 = arith.constant 0 : index
    %c0_1 = arith.constant 0 : index
    %3 = vector.load %arg6[%c0, %c0_1] : memref<2x128xf32, #tpu.memory_space<vmem>>, vector<2x128xf32>
    %c0_2 = arith.constant 0 : index
    %c0_3 = arith.constant 0 : index
    %4 = vector.load %arg3[%c0_2, %c0_3] : memref<2x16xf32, #tpu.memory_space<vmem>>, vector<2x16xf32>
    %c0_4 = arith.constant 0 : index
    %c0_5 = arith.constant 0 : index
    %5 = vector.load %arg4[%c0_4, %c0_5] : memref<128x16xf32, #tpu.memory_space<vmem>>, vector<128x16xf32>
    %cst = arith.constant dense<0.000000e+00> : vector<2x128xf32>
    %6 = tpu.matmul %4, %5, %cst {dimension_numbers = #tpu.dot_dimension_numbers<[1], [1], [0], [0], [0, 0, 1, 0], [], []>} : vector<2x16xf32>, vector<128x16xf32>, vector<2x128xf32> -> vector<2x128xf32>
    %7 = arith.addf %3, %6 : vector<2x128xf32>
    %c0_6 = arith.constant 0 : index
    %c0_7 = arith.constant 0 : index
    %8 = vector.load %arg6[%c0_6, %c0_7] : memref<2x128xf32, #tpu.memory_space<vmem>>, vector<2x128xf32>
    tpu.vector_store %arg6[%c0_6, %c0_7], %7 {strides = array<i32>} : memref<2x128xf32, #tpu.memory_space<vmem>>, vector<2x128xf32>,
    %c0_i32_8 = arith.constant 0 : i32
    %9 = arith.cmpi eq, %arg2, %c0_i32_8 : i32
    %10 = arith.extui %9 : i1 to i32
    %c0_i32_9 = arith.constant 0 : i32
    %11 = arith.cmpi ne, %10, %c0_i32_9 : i32
    scf.if %11 {
      %c0_10 = arith.constant 0 : index
      %c0_11 = arith.constant 0 : index
      %12 = vector.load %arg6[%c0_10, %c0_11] : memref<2x128xf32, #tpu.memory_space<vmem>>, vector<2x128xf32>
      %c0_12 = arith.constant 0 : index
      %c0_13 = arith.constant 0 : index
      %13 = vector.load %arg5[%c0_12, %c0_13] : memref<2x128xf32, #tpu.memory_space<vmem>>, vector<2x128xf32>
      tpu.vector_store %arg5[%c0_12, %c0_13], %12 {strides = array<i32>} : memref<2x128xf32, #tpu.memory_space<vmem>>, vector<2x128xf32>,
    } else {
    }
    return
  }
  func.func @transform_0(%arg0: i32, %arg1: i32, %arg2: i32) -> (i32, i32) {
    %c0_i32 = arith.constant 0 : i32
    return %arg0, %arg2 : i32, i32
  }
  func.func @transform_1(%arg0: i32, %arg1: i32, %arg2: i32) -> (i32, i32) {
    %c0_i32 = arith.constant 0 : i32
    return %arg1, %arg2 : i32, i32
  }
  func.func @transform_2(%arg0: i32, %arg1: i32, %arg2: i32) -> (i32, i32) {
    %c0_i32 = arith.constant 0 : i32
    return %arg0, %arg1 : i32, i32
  }
}

</mosaic_0001>

<llo_original>
// kernel: tpu_custom_call.1
$region0: #{tpu_custom_call.1}
  #allocation0 [shape = 'u32[]', space=smem, size = 0x4, offset = 0x4, fixed_abs, tag = 'smem constant byte address 0x4 - core index']
  #allocation1 [shape = 'u32[144,128]{1,0:T(1,128)}', space=vmem, size = 0x12000, scoped, tag = 'internal scratch']
  #allocation2 [shape = 'f32[2,128]{1,0:T(2,128)}', space=vmem, size = 0x400, scoped, tag = 'scratch operand']
  %s0 = inlined_call_operand.vmem [shape: f32[2,16], index: 0, kind: input, shape index: {}]
  %s1 = inlined_call_operand.vmem [shape: f32[128,16], index: 1, kind: input, shape index: {}]
  %s2 = inlined_call_operand.hbm [shape: f32[2,128], index: 2, kind: output, shape index: {}]
  %s3 = sld [smem:[#allocation0]]
  $region26: #{tpu_custom_call.1} parent=0
    _
  %s5 = ssub.s32 1, %s3
  %s6 = scalar_select 0, %s5, %s3
  $region1: #{tpu_custom_call.1} parent=0
    #allocation3 [shape = 'u8[1024]{0}', space=vmem, size = 0x400, scoped, tag = 'output window, operand 0, single buffered']
    #allocation4 [shape = 's32[1]{0}', space=sflag, size = 0x4, scoped, tag = 'scoped memory for tpu_custom_call.1']
    %7 = vsyncpa [#allocation4], 0
    // Predicated region
    $region2: #{tpu_custom_call.1} parent=1 // pred_check
      _
    $region3: #{tpu_custom_call.1} parent=1 // pred_check_branch
      %9 = sbr.rel (0) target = $region5
    $region4: #{tpu_custom_call.1} parent=1 // pred_region
      _
    $region5: #{tpu_custom_call.1} parent=1 // pred_fallthru
      _
    // Predicated region
    $region6: #{tpu_custom_call.1} parent=1 // pred_check
      _
    $region7: #{tpu_custom_call.1} parent=1 // pred_check_branch
      %11 = sbr.rel (0) target = $region9
    $region8: #{tpu_custom_call.1} parent=1 // pred_region
      _
    $region9: #{tpu_custom_call.1} parent=1 // pred_fallthru
      _
    %p12 = scmp.eq.s32.totalorder 0, 0
    // Predicated region
    $region10: #{tpu_custom_call.1} parent=1 // pred_check
      %p13 = pneg %p12
    $region11: #{tpu_custom_call.1} parent=1 // pred_check_branch
      %15 = sbr.rel (%p13) target = $region13
    $region12: #{tpu_custom_call.1} parent=1 // pred_region
      %16 = vst [vmem:[#allocation2] sm:$0x3] 0.0
    $region13: #{tpu_custom_call.1} parent=1 // pred_fallthru
      _
    %v17 = vld [vmem:[#allocation2] sm:$0x3]
    %v18 = vld [vmem:[%s0] sm:$0x3]
    %v19 = vld [vmem:[%s1] sm:$0xff]
    %v20 = vld [vmem:[%s1 + $0x8] sm:$0xff]
    %v21 = vld [vmem:[%s1 + $0x10] sm:$0xff]
    %v22 = vld [vmem:[%s1 + $0x18] sm:$0xff]
    %v23 = vld [vmem:[%s1 + $0x20] sm:$0xff]
    %v24 = vld [vmem:[%s1 + $0x28] sm:$0xff]
    %v25 = vld [vmem:[%s1 + $0x30] sm:$0xff]
    %v26 = vld [vmem:[%s1 + $0x38] sm:$0xff]
    %v27 = vld [vmem:[%s1 + $0x40] sm:$0xff]
    %v28 = vld [vmem:[%s1 + $0x48] sm:$0xff]
    %v29 = vld [vmem:[%s1 + $0x50] sm:$0xff]
    %v30 = vld [vmem:[%s1 + $0x58] sm:$0xff]
    %v31 = vld [vmem:[%s1 + $0x60] sm:$0xff]
    %v32 = vld [vmem:[%s1 + $0x68] sm:$0xff]
    %v33 = vld [vmem:[%s1 + $0x70] sm:$0xff]
    %v34 = vld [vmem:[%s1 + $0x78] sm:$0xff]
    %vm35 = vcmask 130048
    %v37 = vsel %vm35, %v18, 0
    %v40 = vsel %vm35, %v19, 0
    %v43 = vsel %vm35, %v20, 0
    %v46 = vsel %vm35, %v21, 0
    %v49 = vsel %vm35, %v22, 0
    %v52 = vsel %vm35, %v23, 0
    %v55 = vsel %vm35, %v24, 0
    %v58 = vsel %vm35, %v25, 0
    %v61 = vsel %vm35, %v26, 0
    %v64 = vsel %vm35, %v27, 0
    %v67 = vsel %vm35, %v28, 0
    %v70 = vsel %vm35, %v29, 0
    %v73 = vsel %vm35, %v30, 0
    %v76 = vsel %vm35, %v31, 0
    %v79 = vsel %vm35, %v32, 0
    %v82 = vsel %vm35, %v33, 0
    %v85 = vsel %vm35, %v34, 0
    %87 = vmatprep.subr.mxu0 0.0
    %88 = vmatpush1.xpose.msra.mxu0 %v40
    %89 = vmatprep.subr.mxu0 0.0
    %90 = vmatpush1.xpose.msra.mxu0 %v43
    %91 = vmatprep.subr.mxu0 0.0
    %92 = vmatpush1.xpose.msra.mxu0 %v46
    %93 = vmatprep.subr.mxu0 0.0
    %94 = vmatpush1.xpose.msra.mxu0 %v49
    %95 = vmatprep.subr.mxu0 0.0
    %96 = vmatpush1.xpose.msra.mxu0 %v52
    %97 = vmatprep.subr.mxu0 0.0
    %98 = vmatpush1.xpose.msra.mxu0 %v55
    %99 = vmatprep.subr.mxu0 0.0
    %100 = vmatpush1.xpose.msra.mxu0 %v58
    %101 = vmatprep.subr.mxu0 0.0
    %102 = vmatpush1.xpose.msra.mxu0 %v61
    %103 = vmatprep.subr.mxu0 0.0
    %104 = vmatpush1.xpose.msra.mxu0 %v64
    %105 = vmatprep.subr.mxu0 0.0
    %106 = vmatpush1.xpose.msra.mxu0 %v67
    %107 = vmatprep.subr.mxu0 0.0
    %108 = vmatpush1.xpose.msra.mxu0 %v70
    %109 = vmatprep.subr.mxu0 0.0
    %110 = vmatpush1.xpose.msra.mxu0 %v73
    %111 = vmatprep.subr.mxu0 0.0
    %112 = vmatpush1.xpose.msra.mxu0 %v76
    %113 = vmatprep.subr.mxu0 0.0
    %114 = vmatpush1.xpose.msra.mxu0 %v79
    %115 = vmatprep.subr.mxu0 0.0
    %116 = vmatpush1.xpose.msra.mxu0 %v82
    %117 = vmatprep.subr.mxu0 0.0
    %118 = vmatpush1.xpose.msra.mxu0 %v85
    %119 = vmatprep.subr.mxu0 0.0
    %120 = vmatpush1.xpose.msra.mxu0 0.0
    %121 = vmatprep.subr.mxu0 0.0
    %122 = vmatpush1.xpose.msra.mxu0 0.0
    %123 = vmatprep.subr.mxu0 0.0
    %124 = vmatpush1.xpose.msra.mxu0 0.0
    %125 = vmatprep.subr.mxu0 0.0
    %126 = vmatpush1.xpose.msra.mxu0 0.0
    %127 = vmatprep.subr.mxu0 0.0
    %128 = vmatpush1.xpose.msra.mxu0 0.0
    %129 = vmatprep.subr.mxu0 0.0
    %130 = vmatpush1.xpose.msra.mxu0 0.0
    %131 = vmatprep.subr.mxu0 0.0
    %132 = vmatpush1.xpose.msra.mxu0 0.0
    %133 = vmatprep.subr.mxu0 0.0
    %134 = vmatpush1.xpose.msra.mxu0 0.0
    %135 = vmatprep.subr.mxu0 0.0
    %136 = vmatpush1.xpose.msra.mxu0 0.0
    %137 = vmatprep.subr.mxu0 0.0
    %138 = vmatpush1.xpose.msra.mxu0 0.0
    %139 = vmatprep.subr.mxu0 0.0
    %140 = vmatpush1.xpose.msra.mxu0 0.0
    %141 = vmatprep.subr.mxu0 0.0
    %142 = vmatpush1.xpose.msra.mxu0 0.0
    %143 = vmatprep.subr.mxu0 0.0
    %144 = vmatpush1.xpose.msra.mxu0 0.0
    %145 = vmatprep.subr.mxu0 0.0
    %146 = vmatpush1.xpose.msra.mxu0 0.0
    %147 = vmatprep.subr.mxu0 0.0
    %148 = vmatpush1.xpose.msra.mxu0 0.0
    %149 = vmatprep.subr.mxu0 0.0
    %150 = vmatpush1.xpose.msra.mxu0 0.0
    %151 = vmatprep.mubr.f32.mxu0 0.0
    %152 = vmatmul.mubr.f32.gmra.mrb[0].mxu0 %v37
    %v153 = vpop.f32.mrb[0].mxu0
    %v154 = vadd.f32 0.0, %v153
    %v155 = vpop.f32.mrb[0].mxu0
    %156 = vdwg.mxu0
    %v157 = vadd.f32 %v17, %v154
    %158 = vst [vmem:[#allocation2] sm:$0x3] %v157
    // Predicated region
    $region14: #{tpu_custom_call.1} parent=1 // pred_check
      %p159 = pneg %p12
    $region15: #{tpu_custom_call.1} parent=1 // pred_check_branch
      %161 = sbr.rel (%p159) target = $region17
    $region16: #{tpu_custom_call.1} parent=1 // pred_region
      %v162 = vld [vmem:[#allocation2] sm:$0x3]
      %163 = vst [vmem:[#allocation3] sm:$0x3] %v162
    $region17: #{tpu_custom_call.1} parent=1 // pred_fallthru
      _
    // Predicated region
    $region18: #{tpu_custom_call.1} parent=1 // pred_check
      _
    $region19: #{tpu_custom_call.1} parent=1 // pred_check_branch
      %165 = sbr.rel (0) target = $region21
    $region20: #{tpu_custom_call.1} parent=1 // pred_region
      %s167 = ssub.s32 32, 32
      %168 = vsyncadd [#allocation4], %s167
      %s170 = sshll.u32 [#allocation3], 4
      %s171 = int_to_ptr.vmem [resolvable:$true] %s170
      %173 = dma.vmem_to_hbm [thread:$0]  %s171, 32, %s2, [#allocation4]
    $region21: #{tpu_custom_call.1} parent=1 // pred_fallthru
      _
    // Predicated region
    $region22: #{tpu_custom_call.1} parent=1 // pred_check
      _
    $region23: #{tpu_custom_call.1} parent=1 // pred_check_branch
      %175 = sbr.rel (0) target = $region25
    $region24: #{tpu_custom_call.1} parent=1 // pred_region
      %176 = dma.done [#allocation4], 32
    $region25: #{tpu_custom_call.1} parent=1 // pred_fallthru
      _
    %177 = vsyncpa [#allocation4], 1

</llo_original>
